<compile_context>
chip_gen: v6e
topology: v6e:2x2x1
jax: 0.10.0
libtpu: 0.0.40
codegen_flags: <defaults>
</compile_context>

<pallas_src>
import functools

import jax
import jax.numpy as jnp
from jax.experimental import pallas as pl
from jax.experimental.pallas import tpu as pltpu


def _bilinear_matrix(out_size: int, in_size: int) -> jnp.ndarray:
    """Row-stochastic (out_size, in_size) bilinear interp matrix.

    Matches torch.nn.functional.interpolate(mode='bilinear', align_corners=False),
    which is what Kornia's Resize uses by default.
    """
    scale = in_size / out_size
    dst = jnp.arange(out_size, dtype=jnp.float32)
    src = (dst + 0.5) * scale - 0.5
    src = jnp.clip(src, 0.0, float(in_size - 1))
    lo = jnp.floor(src).astype(jnp.int32)
    hi = jnp.minimum(lo + 1, in_size - 1)
    w_hi = src - lo.astype(jnp.float32)
    w_lo = 1.0 - w_hi
    rows = jnp.arange(out_size)
    m = jnp.zeros((out_size, in_size), jnp.float32)
    m = m.at[rows, lo].add(w_lo)
    m = m.at[rows, hi].add(w_hi)
    return m


def _vmem_capacity_bytes() -> int:
    """Per-core VMEM capacity; conservative v7x fallback if the query is unavailable."""
    try:
        return int(pltpu.get_tpu_info().vmem_capacity_bytes)
    except Exception:
        return 64 * 1024 * 1024


def _choose_tile_n(n: int, c: int, h: int, w: int, s: int,
                   budget_bytes: int, max_tile: int = 8) -> int:
    """VMEM-aware tile along N that also keeps the grid deep enough for pipelining."""
    def block_bytes(t):
        p = t * c
        x_blk = 2 * p * h * w * 4                       # input block, double-buffered (f32)
        o_blk = 2 * p * s * s * 4                       # output block, double-buffered
        tmp = p * h * w * 2 + p * h * s * (4 + 2) + 2 * s * s * 4   # bf16 img + stage-1 f32/bf16 + out plane
        return x_blk + o_blk + tmp

    t = max(1, min(max_tile, n))
    while t > 1 and block_bytes(t) > budget_bytes:      # fit the VMEM budget
        t -= 1
    target_steps = min(n, 8)                            # >= 4 steps per TC on v7x once N >= 8
    while t > 1 and -(-n // t) < target_steps:          # keep pipeline / megacore depth
        t -= 1
    return t


def _aug_kernel(x_ref, rw_t_ref, rh_ref, scale_ref, bias_ref, o_ref):
    # x_ref:     (TILE_N, C, H, W)  f32   -- streamed block of input images
    # rw_t_ref:  (W, S)             bf16  -- W interp matrix, flip fused, pre-transposed (resident)
    # rh_ref:    (S, H)             bf16  -- H interp matrix (resident)
    # scale_ref: (C, 1, S)          f32   -- per-channel 1/std (resident)
    # bias_ref:  (C, 1, S)          f32   -- per-channel -mean/std (resident)
    # o_ref:     (TILE_N, C, S, S)
    tile_n, C, H, W = x_ref.shape
    S = o_ref.shape[-1]
    P = tile_n * C

    # Stage 1: contract W for ALL planes with a single flat 2D MXU matmul.
    # Leading-dim merge (tile_n, C, H) -> P*H is layout-preserving; no broadcasts materialized.
    img2d = x_ref[...].reshape(P * H, W).astype(jnp.bfloat16)           # (P*H, W)  bf16
    a = jnp.dot(img2d, rw_t_ref[...],
                preferred_element_type=jnp.float32)                     # (P*H, S)  f32
    a = a.reshape(P, H, S).astype(jnp.bfloat16)                         # (P, H, S) bf16

    # Stage 2: contract H plane-by-plane against the shared resident matrix (no broadcast of
    # R_h over the batch); each (S,S) plane is normalized and stored straight to o_ref so the
    # live working set stays one plane wide.
    rh = rh_ref[...]                                                    # (S, H) bf16
    scales = [scale_ref[c] for c in range(C)]                           # (1, S) each
    biases = [bias_ref[c] for c in range(C)]
    for p in range(P):                                                  # static unroll, P small
        n_i, c_i = p // C, p % C
        plane = jnp.dot(rh, a[p], preferred_element_type=jnp.float32)   # (S, S) f32
        plane = plane * scales[c_i] + biases[c_i]                       # fused normalize (FMA)
        o_ref[n_i, c_i] = plane.astype(o_ref.dtype)


@functools.partial(jax.jit, static_argnames=("inp_size", "tile_n", "out_dtype"))
def data_augmentation(x, mean, std, *, inp_size, tile_n=None, out_dtype=None):
    """x: (N, C, H, W) float32 NCHW. Returns (N, C, inp_size, inp_size) in out_dtype (default x.dtype)."""
    N, C, H, W = x.shape
    S = inp_size
    out_dtype = x.dtype if out_dtype is None else out_dtype

    vmem_cap = _vmem_capacity_bytes()
    if tile_n is None:
        tile_n = _choose_tile_n(N, C, H, W, S, budget_bytes=vmem_cap // 2)
    grid_n = -(-N // tile_n)
    n_pad = grid_n * tile_n
    if n_pad != N:  # pad awkward batch sizes instead of degrading to tile_n=1 / uneven tiles
        x = jnp.pad(x, ((0, n_pad - N), (0, 0), (0, 0), (0, 0)))

    # Trace-time constants: interp matrices in bf16 with the horizontal flip fused into R_w
    # (row reversal) and pre-transposed so the kernel never transposes.
    rh = _bilinear_matrix(S, H).astype(jnp.bfloat16)                     # (S, H)
    rw_flip_t = _bilinear_matrix(S, W)[::-1, :].T.astype(jnp.bfloat16)   # (W, S)

    # Per-channel affine normalization constants:  (x - m)/s == x * (1/s) + (-m/s).
    inv_std = (1.0 / std).astype(jnp.float32)
    neg_mean_over_std = (-mean * inv_std).astype(jnp.float32)
    scale = jnp.broadcast_to(inv_std[:, None, None], (C, 1, S))
    bias = jnp.broadcast_to(neg_mean_over_std[:, None, None], (C, 1, S))

    out = pl.pallas_call(
        _aug_kernel,
        out_shape=jax.ShapeDtypeStruct((n_pad, C, S, S), out_dtype),
        grid_spec=pltpu.PrefetchScalarGridSpec(
            num_scalar_prefetch=0,
            grid=(grid_n,),
            in_specs=[
                pl.BlockSpec((tile_n, C, H, W), lambda n: (n, 0, 0, 0)),  # streamed input block
                pl.BlockSpec((W, S), lambda n: (0, 0)),                   # R_w_flip^T (resident)
                pl.BlockSpec((S, H), lambda n: (0, 0)),                   # R_h        (resident)
                pl.BlockSpec((C, 1, S), lambda n: (0, 0, 0)),             # scale      (resident)
                pl.BlockSpec((C, 1, S), lambda n: (0, 0, 0)),             # bias       (resident)
            ],
            out_specs=pl.BlockSpec((tile_n, C, S, S), lambda n: (n, 0, 0, 0)),
        ),
        compiler_params=pltpu.CompilerParams(
            dimension_semantics=("parallel",),
            vmem_limit_bytes=min(vmem_cap * 3 // 4, 96 * 1024 * 1024),
        ),
    )(x, rw_flip_t, rh, scale, bias)

    return out[:N] if n_pad != N else out


def _reference(x, mean, std, inp_size, *, bf16=False):
    """Pure-JAX reference of the same deterministic pipeline.

    With bf16=True both matmul operands AND the inter-stage intermediate are rounded to bf16
    (f32 accumulation), matching the kernel's MXU precision exactly.
    """
    N, C, H, W = x.shape
    S = inp_size
    rh = _bilinear_matrix(S, H)
    rw = _bilinear_matrix(S, W)
    xr, rhr, rwr = x, rh, rw
    if bf16:
        xr = x.astype(jnp.bfloat16)
        rhr = rh.astype(jnp.bfloat16)
        rwr = rw.astype(jnp.bfloat16)
    t = jnp.einsum("nchw,sw->nchs", xr, rwr, preferred_element_type=jnp.float32)
    if bf16:
        t = t.astype(jnp.bfloat16)          # match the kernel's inter-stage rounding
    resized = jnp.einsum("th,nchs->ncts", rhr, t, preferred_element_type=jnp.float32)
    flipped = resized[..., ::-1]            # horizontal flip
    return (flipped - mean[None, :, None, None]) / std[None, :, None, None]


if __name__ == "__main__":
    key = jax.random.PRNGKey(0)
    N, C, H, W = 4, 3, 20, 20
    INP_SIZE = 16

    x = jax.random.uniform(key, (N, C, H, W), dtype=jnp.float32)
    # Deterministic "parameters" of the module (ImageNet-style mean/std, 3 channels).
    mean = jnp.array([0.485, 0.456, 0.406], dtype=jnp.float32)
    std = jnp.array([0.229, 0.224, 0.225], dtype=jnp.float32)

    out = data_augmentation(x, mean, std, inp_size=INP_SIZE)
    out = jax.block_until_ready(out)
    assert out.shape == (N, C, INP_SIZE, INP_SIZE)

    # Tight check against a reference evaluated at the kernel's precision
    # (bf16 matmul operands + bf16 inter-stage rounding, f32 accumulation).
    ref_bf16 = _reference(x, mean, std, INP_SIZE, bf16=True)
    assert jnp.allclose(out, ref_bf16, atol=2e-2, rtol=2e-2), "mismatch vs bf16-precision reference"

    # Looser sanity check against the exact f32 pipeline.
    ref_f32 = _reference(x, mean, std, INP_SIZE, bf16=False)
    assert jnp.allclose(out, ref_f32, atol=6e-2, rtol=6e-2), "mismatch vs f32 reference"

    # Exercise the padding path (odd batch) and a multi-image tile.
    x5 = jax.random.uniform(jax.random.PRNGKey(1), (5, C, H, W), dtype=jnp.float32)
    out5 = jax.block_until_ready(data_augmentation(x5, mean, std, inp_size=INP_SIZE, tile_n=2))
    assert out5.shape == (5, C, INP_SIZE, INP_SIZE)
    ref5 = _reference(x5, mean, std, INP_SIZE, bf16=True)
    assert jnp.allclose(out5, ref5, atol=2e-2, rtol=2e-2), "mismatch on padded-batch path"

    print("KERNEL_OK")
</pallas_src>

<mosaic_0001>
module attributes {stable_mosaic.version = 11 : i64} {
  func.func private @main(%arg0: i32) attributes {dimension_semantics = [#tpu.dimension_semantics<core_parallel>], iteration_bounds = array<i64: 2>, tpu.core_type = #tpu.core_type<sc_scalar_subcore>, window_params = []} {
    return
  }
}

module attributes {stable_mosaic.version = 11 : i64} {
  func.func private @main(%arg0: i32) attributes {dimension_semantics = [#tpu.dimension_semantics<core_parallel>], iteration_bounds = array<i64: 2>, tpu.core_type = #tpu.core_type<sc_scalar_subcore>, window_params = []} {
    return
  }
}

module attributes {stable_mosaic.version = 11 : i64} {
  func.func @_aug_kernel(%arg0: i32, %arg1: memref<1x3x20x20xf32, #tpu.memory_space<vmem>>, %arg2: memref<20x16xbf16, #tpu.memory_space<vmem>>, %arg3: memref<16x20xbf16, #tpu.memory_space<vmem>>, %arg4: memref<3x1x16xf32, #tpu.memory_space<vmem>>, %arg5: memref<3x1x16xf32, #tpu.memory_space<vmem>>, %arg6: memref<1x3x16x16xf32, #tpu.memory_space<vmem>>) attributes {dimension_semantics = [#tpu.dimension_semantics<parallel>], iteration_bounds = array<i64: 4>, scalar_prefetch = 0 : i64, scratch_operands = 0 : i64, tpu.core_type = #tpu.core_type<tc>, window_params = [{transform_indices = @transform_0, window_bounds = array<i64: 1, 3, 20, 20>}, {pipeline_mode = #tpu.pipeline_mode<synchronous>, transform_indices = @transform_1, window_bounds = array<i64: 20, 16>}, {pipeline_mode = #tpu.pipeline_mode<synchronous>, transform_indices = @transform_2, window_bounds = array<i64: 16, 20>}, {pipeline_mode = #tpu.pipeline_mode<synchronous>, transform_indices = @transform_3, window_bounds = array<i64: 3, 1, 16>}, {pipeline_mode = #tpu.pipeline_mode<synchronous>, transform_indices = @transform_4, window_bounds = array<i64: 3, 1, 16>}, {transform_indices = @transform_5, window_bounds = array<i64: 1, 3, 16, 16>}]} {
    %c0 = arith.constant 0 : index
    %c0_0 = arith.constant 0 : index
    %c0_1 = arith.constant 0 : index
    %c0_2 = arith.constant 0 : index
    %0 = vector.load %arg1[%c0, %c0_0, %c0_1, %c0_2] : memref<1x3x20x20xf32, #tpu.memory_space<vmem>>, vector<1x3x20x20xf32>
    %1 = vector.shape_cast %0 : vector<1x3x20x20xf32> to vector<60x20xf32>
    %2 = arith.truncf %1 : vector<60x20xf32> to vector<60x20xbf16>
    %c0_3 = arith.constant 0 : index
    %c0_4 = arith.constant 0 : index
    %3 = vector.load %arg2[%c0_3, %c0_4] : memref<20x16xbf16, #tpu.memory_space<vmem>>, vector<20x16xbf16>
    %cst = arith.constant dense<0.000000e+00> : vector<60x16xf32>
    %4 = tpu.matmul %2, %3, %cst {dimension_numbers = #tpu.dot_dimension_numbers<[1], [0], [0], [1], [0, 0, 1, 1], [], []>} : vector<60x20xbf16>, vector<20x16xbf16>, vector<60x16xf32> -> vector<60x16xf32>
    %5 = vector.shape_cast %4 : vector<60x16xf32> to vector<3x20x16xf32>
    %6 = arith.truncf %5 : vector<3x20x16xf32> to vector<3x20x16xbf16>
    %c0_5 = arith.constant 0 : index
    %c0_6 = arith.constant 0 : index
    %7 = vector.load %arg3[%c0_5, %c0_6] : memref<16x20xbf16, #tpu.memory_space<vmem>>, vector<16x20xbf16>
    %c0_7 = arith.constant 0 : index
    %c0_8 = arith.constant 0 : index
    %c0_9 = arith.constant 0 : index
    %8 = vector.load %arg4[%c0_7, %c0_8, %c0_9] : memref<3x1x16xf32, #tpu.memory_space<vmem>>, vector<1x1x16xf32>
    %9 = vector.shape_cast %8 : vector<1x1x16xf32> to vector<1x16xf32>
    %c1 = arith.constant 1 : index
    %c0_10 = arith.constant 0 : index
    %c0_11 = arith.constant 0 : index
    %10 = vector.load %arg4[%c1, %c0_10, %c0_11] : memref<3x1x16xf32, #tpu.memory_space<vmem>>, vector<1x1x16xf32>
    %11 = vector.shape_cast %10 : vector<1x1x16xf32> to vector<1x16xf32>
    %c2 = arith.constant 2 : index
    %c0_12 = arith.constant 0 : index
    %c0_13 = arith.constant 0 : index
    %12 = vector.load %arg4[%c2, %c0_12, %c0_13] : memref<3x1x16xf32, #tpu.memory_space<vmem>>, vector<1x1x16xf32>
    %13 = vector.shape_cast %12 : vector<1x1x16xf32> to vector<1x16xf32>
    %c0_14 = arith.constant 0 : index
    %c0_15 = arith.constant 0 : index
    %c0_16 = arith.constant 0 : index
    %14 = vector.load %arg5[%c0_14, %c0_15, %c0_16] : memref<3x1x16xf32, #tpu.memory_space<vmem>>, vector<1x1x16xf32>
    %15 = vector.shape_cast %14 : vector<1x1x16xf32> to vector<1x16xf32>
    %c1_17 = arith.constant 1 : index
    %c0_18 = arith.constant 0 : index
    %c0_19 = arith.constant 0 : index
    %16 = vector.load %arg5[%c1_17, %c0_18, %c0_19] : memref<3x1x16xf32, #tpu.memory_space<vmem>>, vector<1x1x16xf32>
    %17 = vector.shape_cast %16 : vector<1x1x16xf32> to vector<1x16xf32>
    %c2_20 = arith.constant 2 : index
    %c0_21 = arith.constant 0 : index
    %c0_22 = arith.constant 0 : index
    %18 = vector.load %arg5[%c2_20, %c0_21, %c0_22] : memref<3x1x16xf32, #tpu.memory_space<vmem>>, vector<1x1x16xf32>
    %19 = vector.shape_cast %18 : vector<1x1x16xf32> to vector<1x16xf32>
    %20 = vector.extract_strided_slice %6 {offsets = [0, 0, 0], sizes = [1, 20, 16], strides = [1, 1, 1]} : vector<3x20x16xbf16> to vector<1x20x16xbf16>
    %21 = vector.shape_cast %20 : vector<1x20x16xbf16> to vector<20x16xbf16>
    %cst_23 = arith.constant dense<0.000000e+00> : vector<16x16xf32>
    %22 = tpu.matmul %7, %21, %cst_23 {dimension_numbers = #tpu.dot_dimension_numbers<[1], [0], [0], [1], [0, 0, 1, 1], [], []>} : vector<16x20xbf16>, vector<20x16xbf16>, vector<16x16xf32> -> vector<16x16xf32>
    %23 = vector.broadcast %9 : vector<1x16xf32> to vector<16x16xf32>
    %24 = arith.mulf %22, %23 : vector<16x16xf32>
    %25 = vector.broadcast %15 : vector<1x16xf32> to vector<16x16xf32>
    %26 = arith.addf %24, %25 : vector<16x16xf32>
    %c0_24 = arith.constant 0 : index
    %c0_25 = arith.constant 0 : index
    %c0_26 = arith.constant 0 : index
    %c0_27 = arith.constant 0 : index
    %27 = vector.load %arg6[%c0_24, %c0_25, %c0_26, %c0_27] : memref<1x3x16x16xf32, #tpu.memory_space<vmem>>, vector<1x1x16x16xf32>
    %28 = vector.shape_cast %27 : vector<1x1x16x16xf32> to vector<16x16xf32>
    %29 = vector.shape_cast %26 : vector<16x16xf32> to vector<1x1x16x16xf32>
    tpu.vector_store %arg6[%c0_24, %c0_25, %c0_26, %c0_27], %29 {strides = array<i32>} : memref<1x3x16x16xf32, #tpu.memory_space<vmem>>, vector<1x1x16x16xf32>,
    %30 = vector.extract_strided_slice %6 {offsets = [1, 0, 0], sizes = [1, 20, 16], strides = [1, 1, 1]} : vector<3x20x16xbf16> to vector<1x20x16xbf16>
    %31 = vector.shape_cast %30 : vector<1x20x16xbf16> to vector<20x16xbf16>
    %cst_28 = arith.constant dense<0.000000e+00> : vector<16x16xf32>
    %32 = tpu.matmul %7, %31, %cst_28 {dimension_numbers = #tpu.dot_dimension_numbers<[1], [0], [0], [1], [0, 0, 1, 1], [], []>} : vector<16x20xbf16>, vector<20x16xbf16>, vector<16x16xf32> -> vector<16x16xf32>
    %33 = vector.broadcast %11 : vector<1x16xf32> to vector<16x16xf32>
    %34 = arith.mulf %32, %33 : vector<16x16xf32>
    %35 = vector.broadcast %17 : vector<1x16xf32> to vector<16x16xf32>
    %36 = arith.addf %34, %35 : vector<16x16xf32>
    %c0_29 = arith.constant 0 : index
    %c1_30 = arith.constant 1 : index
    %c0_31 = arith.constant 0 : index
    %c0_32 = arith.constant 0 : index
    %37 = vector.load %arg6[%c0_29, %c1_30, %c0_31, %c0_32] : memref<1x3x16x16xf32, #tpu.memory_space<vmem>>, vector<1x1x16x16xf32>
    %38 = vector.shape_cast %37 : vector<1x1x16x16xf32> to vector<16x16xf32>
    %39 = vector.shape_cast %36 : vector<16x16xf32> to vector<1x1x16x16xf32>
    tpu.vector_store %arg6[%c0_29, %c1_30, %c0_31, %c0_32], %39 {strides = array<i32>} : memref<1x3x16x16xf32, #tpu.memory_space<vmem>>, vector<1x1x16x16xf32>,
    %40 = vector.extract_strided_slice %6 {offsets = [2, 0, 0], sizes = [1, 20, 16], strides = [1, 1, 1]} : vector<3x20x16xbf16> to vector<1x20x16xbf16>
    %41 = vector.shape_cast %40 : vector<1x20x16xbf16> to vector<20x16xbf16>
    %cst_33 = arith.constant dense<0.000000e+00> : vector<16x16xf32>
    %42 = tpu.matmul %7, %41, %cst_33 {dimension_numbers = #tpu.dot_dimension_numbers<[1], [0], [0], [1], [0, 0, 1, 1], [], []>} : vector<16x20xbf16>, vector<20x16xbf16>, vector<16x16xf32> -> vector<16x16xf32>
    %43 = vector.broadcast %13 : vector<1x16xf32> to vector<16x16xf32>
    %44 = arith.mulf %42, %43 : vector<16x16xf32>
    %45 = vector.broadcast %19 : vector<1x16xf32> to vector<16x16xf32>
    %46 = arith.addf %44, %45 : vector<16x16xf32>
    %c0_34 = arith.constant 0 : index
    %c2_35 = arith.constant 2 : index
    %c0_36 = arith.constant 0 : index
    %c0_37 = arith.constant 0 : index
    %47 = vector.load %arg6[%c0_34, %c2_35, %c0_36, %c0_37] : memref<1x3x16x16xf32, #tpu.memory_space<vmem>>, vector<1x1x16x16xf32>
    %48 = vector.shape_cast %47 : vector<1x1x16x16xf32> to vector<16x16xf32>
    %49 = vector.shape_cast %46 : vector<16x16xf32> to vector<1x1x16x16xf32>
    tpu.vector_store %arg6[%c0_34, %c2_35, %c0_36, %c0_37], %49 {strides = array<i32>} : memref<1x3x16x16xf32, #tpu.memory_space<vmem>>, vector<1x1x16x16xf32>,
    return
  }
  func.func @transform_0(%arg0: i32) -> (i32, i32, i32, i32) {
    %c0_i32 = arith.constant 0 : i32
    %c0_i32_0 = arith.constant 0 : i32
    %c0_i32_1 = arith.constant 0 : i32
    %c0_i32_2 = arith.constant 0 : i32
    return %arg0, %c0_i32, %c0_i32_0, %c0_i32_1 : i32, i32, i32, i32
  }
  func.func @transform_1(%arg0: i32) -> (i32, i32) {
    %c0_i32 = arith.constant 0 : i32
    %c0_i32_0 = arith.constant 0 : i32
    %c0_i32_1 = arith.constant 0 : i32
    return %c0_i32, %c0_i32_0 : i32, i32
  }
  func.func @transform_2(%arg0: i32) -> (i32, i32) {
    %c0_i32 = arith.constant 0 : i32
    %c0_i32_0 = arith.constant 0 : i32
    %c0_i32_1 = arith.constant 0 : i32
    return %c0_i32, %c0_i32_0 : i32, i32
  }
  func.func @transform_3(%arg0: i32) -> (i32, i32, i32) {
    %c0_i32 = arith.constant 0 : i32
    %c0_i32_0 = arith.constant 0 : i32
    %c0_i32_1 = arith.constant 0 : i32
    %c0_i32_2 = arith.constant 0 : i32
    return %c0_i32, %c0_i32_0, %c0_i32_1 : i32, i32, i32
  }
  func.func @transform_4(%arg0: i32) -> (i32, i32, i32) {
    %c0_i32 = arith.constant 0 : i32
    %c0_i32_0 = arith.constant 0 : i32
    %c0_i32_1 = arith.constant 0 : i32
    %c0_i32_2 = arith.constant 0 : i32
    return %c0_i32, %c0_i32_0, %c0_i32_1 : i32, i32, i32
  }
  func.func @transform_5(%arg0: i32) -> (i32, i32, i32, i32) {
    %c0_i32 = arith.constant 0 : i32
    %c0_i32_0 = arith.constant 0 : i32
    %c0_i32_1 = arith.constant 0 : i32
    %c0_i32_2 = arith.constant 0 : i32
    return %arg0, %c0_i32, %c0_i32_0, %c0_i32_1 : i32, i32, i32, i32
  }
}

</mosaic_0001>

<llo_original>
// kernel: data_augmentation.1
$region0: #{data_augmentation.1}
  #allocation0 [shape = 'u32[]', space=smem, size = 0x4, offset = 0x4, fixed_abs, tag = 'smem constant byte address 0x4 - core index']
  #allocation1 [shape = 'u32[144,128]{1,0:T(1,128)}', space=vmem, size = 0x12000, scoped, tag = 'internal scratch']
  %s0 = inlined_call_operand.vmem [shape: f32[4,3,20,20], index: 0, kind: input, shape index: {}]
  %s1 = inlined_call_operand.vmem [shape: bf16[20,16], index: 1, kind: input, shape index: {}]
  %s2 = inlined_call_operand.vmem [shape: bf16[16,20], index: 2, kind: input, shape index: {}]
  %s3 = inlined_call_operand.vmem [shape: f32[3,1,16], index: 3, kind: input, shape index: {}]
  %s4 = inlined_call_operand.vmem [shape: f32[3,1,16], index: 4, kind: input, shape index: {}]
  %s5 = inlined_call_operand.hbm [shape: f32[4,3,16,16], index: 5, kind: output, shape index: {}]
  %s6 = sld [smem:[#allocation0]]
  $region53: #{data_augmentation.1} parent=0
    _
  %s8 = ssub.s32 1, %s6
  %s9 = scalar_select 0, %s8, %s6
  $region1: #{data_augmentation.1} parent=0
    #allocation2 [shape = 'u8[49152]{0}', space=vmem, size = 0xc000, scoped, tag = 'output window, operand 0']
    #allocation3 [shape = 's32[2]{0}', space=sflag, size = 0x8, scoped, tag = 'scoped memory for data_augmentation.1']
    %10 = vsyncpa [#allocation3], 0
    %s11 = scalar_lea.sflag [#allocation3], 1
    %12 = vsyncpa %s11, 0
    loop: start=0, step=1, limit=6
    $region2: #{data_augmentation.1} parent=1 // loop_pre_header
      _
    $region3: #{data_augmentation.1} parent=1 // loop_header
      %s14 = sphi 0, %s18
      %p15 = scmp.ge.s32.totalorder %s14, 6
      %s24 = sphi 0, %s26
      %s27 = sphi 0, %s24
      %s28 = sphi 0, %s27
      %s44 = sphi 0, %s28
      %s48 = sphi 0, %s48
      %s50 = sphi 0, %s48
      %s51 = sphi 0, %s50
      %s65 = sphi 0, %s51
      %s69 = sphi 0, %s69
      %s71 = sphi 0, %s69
      %s72 = sphi 0, %s71
      %s86 = sphi 0, %s72
      %s90 = sphi 0, %s90
      %s92 = sphi 0, %s90
      %s93 = sphi 0, %s92
      %s107 = sphi 0, %s93
      %s111 = sphi 0, %s111
      %s113 = sphi 0, %s111
      %s114 = sphi 0, %s113
      %s128 = sphi 0, %s114
      %s134 = sphi 0, %s136
      %s137 = sphi 0, %s134
      %s138 = sphi 0, %s137
      %s154 = sphi 0, %s138
    $region4: #{data_augmentation.1} parent=1 // loop_header_branch
      %17 = sbr.rel (%p15) target = $region8
    $region5: #{data_augmentation.1} parent=1 // loop_body
      %s19 = ssub.s32 %s14, 1
      %s20 = ssub.s32 %s14, 2
      %s21 = sadd.s32 %s14, 1
      %s22 = ssub.s32 %s14, %s21
      %p23 = scmp.eq.s32.totalorder %s22, 0
      %s25 = sadd.s32 %s24, 1
      %s26 = scalar_select %p23, %s24, %s25
      %p29 = pneg %p23
      %p30 = scmp.eq.s32.totalorder %s14, 3
      %p31 = por %p29, %p30
      %p32 = scmp.ne.s32.totalorder %s24, %s27
      %p33 = scmp.eq.s32.totalorder %s14, 0
      %p34 = por %p32, %p33
      %p35 = scmp.ne.s32.totalorder %s24, %s27
      %p36 = scmp.eq.s32.totalorder %s19, 3
      %p37 = por %p35, %p36
      %p38 = scmp.ne.s32.totalorder %s27, %s28
      %p39 = scmp.eq.s32.totalorder %s19, 0
      %p40 = por %p38, %p39
      %p41 = scmp.ne.s32.totalorder %s27, %s28
      %p42 = scmp.eq.s32.totalorder %s20, 3
      %p43 = por %p41, %p42
      %p45 = scmp.ne.s32.totalorder %s28, %s44
      %p46 = scmp.eq.s32.totalorder %s20, 0
      %p47 = por %p45, %p46
      %s49 = sadd.s32 %s48, 1
      %p52 = scmp.eq.s32.totalorder %s14, 3
      %p53 = scmp.ne.s32.totalorder %s48, %s50
      %p54 = scmp.eq.s32.totalorder %s14, 0
      %p55 = por %p53, %p54
      %p56 = scmp.ne.s32.totalorder %s48, %s50
      %p57 = scmp.eq.s32.totalorder %s19, 3
      %p58 = por %p56, %p57
      %p59 = scmp.ne.s32.totalorder %s50, %s51
      %p60 = scmp.eq.s32.totalorder %s19, 0
      %p61 = por %p59, %p60
      %p62 = scmp.ne.s32.totalorder %s50, %s51
      %p63 = scmp.eq.s32.totalorder %s20, 3
      %p64 = por %p62, %p63
      %p66 = scmp.ne.s32.totalorder %s51, %s65
      %p67 = scmp.eq.s32.totalorder %s20, 0
      %p68 = por %p66, %p67
      %s70 = sadd.s32 %s69, 1
      %p73 = scmp.eq.s32.totalorder %s14, 3
      %p74 = scmp.ne.s32.totalorder %s69, %s71
      %p75 = scmp.eq.s32.totalorder %s14, 0
      %p76 = por %p74, %p75
      %p77 = scmp.ne.s32.totalorder %s69, %s71
      %p78 = scmp.eq.s32.totalorder %s19, 3
      %p79 = por %p77, %p78
      %p80 = scmp.ne.s32.totalorder %s71, %s72
      %p81 = scmp.eq.s32.totalorder %s19, 0
      %p82 = por %p80, %p81
      %p83 = scmp.ne.s32.totalorder %s71, %s72
      %p84 = scmp.eq.s32.totalorder %s20, 3
      %p85 = por %p83, %p84
      %p87 = scmp.ne.s32.totalorder %s72, %s86
      %p88 = scmp.eq.s32.totalorder %s20, 0
      %p89 = por %p87, %p88
      %s91 = sadd.s32 %s90, 1
      %p94 = scmp.eq.s32.totalorder %s14, 3
      %p95 = scmp.ne.s32.totalorder %s90, %s92
      %p96 = scmp.eq.s32.totalorder %s14, 0
      %p97 = por %p95, %p96
      %p98 = scmp.ne.s32.totalorder %s90, %s92
      %p99 = scmp.eq.s32.totalorder %s19, 3
      %p100 = por %p98, %p99
      %p101 = scmp.ne.s32.totalorder %s92, %s93
      %p102 = scmp.eq.s32.totalorder %s19, 0
      %p103 = por %p101, %p102
      %p104 = scmp.ne.s32.totalorder %s92, %s93
      %p105 = scmp.eq.s32.totalorder %s20, 3
      %p106 = por %p104, %p105
      %p108 = scmp.ne.s32.totalorder %s93, %s107
      %p109 = scmp.eq.s32.totalorder %s20, 0
      %p110 = por %p108, %p109
      %s112 = sadd.s32 %s111, 1
      %p115 = scmp.eq.s32.totalorder %s14, 3
      %p116 = scmp.ne.s32.totalorder %s111, %s113
      %p117 = scmp.eq.s32.totalorder %s14, 0
      %p118 = por %p116, %p117
      %p119 = scmp.ne.s32.totalorder %s111, %s113
      %p120 = scmp.eq.s32.totalorder %s19, 3
      %p121 = por %p119, %p120
      %p122 = scmp.ne.s32.totalorder %s113, %s114
      %p123 = scmp.eq.s32.totalorder %s19, 0
      %p124 = por %p122, %p123
      %p125 = scmp.ne.s32.totalorder %s113, %s114
      %p126 = scmp.eq.s32.totalorder %s20, 3
      %p127 = por %p125, %p126
      %p129 = scmp.ne.s32.totalorder %s114, %s128
      %p130 = scmp.eq.s32.totalorder %s20, 0
      %p131 = por %p129, %p130
      %s132 = ssub.s32 %s14, %s21
      %p133 = scmp.eq.s32.totalorder %s132, 0
      %s135 = sadd.s32 %s134, 1
      %s136 = scalar_select %p133, %s134, %s135
      %p139 = pneg %p133
      %p140 = scmp.eq.s32.totalorder %s14, 3
      %p141 = por %p139, %p140
      %p142 = scmp.ne.s32.totalorder %s134, %s137
      %p143 = scmp.eq.s32.totalorder %s14, 0
      %p144 = por %p142, %p143
      %p145 = scmp.ne.s32.totalorder %s134, %s137
      %p146 = scmp.eq.s32.totalorder %s19, 3
      %p147 = por %p145, %p146
      %p148 = scmp.ne.s32.totalorder %s137, %s138
      %p149 = scmp.eq.s32.totalorder %s19, 0
      %p150 = por %p148, %p149
      %p151 = scmp.ne.s32.totalorder %s137, %s138
      %p152 = scmp.eq.s32.totalorder %s20, 3
      %p153 = por %p151, %p152
      %p155 = scmp.ne.s32.totalorder %s138, %s154
      %p156 = scmp.eq.s32.totalorder %s20, 0
      %p157 = por %p155, %p156
      %p158 = scmp.le.s32.totalorder 1, %s14
      %p159 = scmp.lt.s32.totalorder %s14, 5
      %p160 = pnand %p158, %p159
      %p161 = pneg %p160
      // Predicated region
      $region9: #{data_augmentation.1} parent=5 // pred_check
        _
      $region10: #{data_augmentation.1} parent=5 // pred_check_branch
        %163 = sbr.rel (%p160) target = $region12
      $region11: #{data_augmentation.1} parent=5 // pred_region
        %s164 = ssub.s32 %s14, 1
        // Predicated region
        $region13: #{data_augmentation.1} parent=11 // pred_check
          %p165 = pneg %p61
        $region14: #{data_augmentation.1} parent=11 // pred_check_branch
          %167 = sbr.rel (%p165) target = $region16
        $region15: #{data_augmentation.1} parent=11 // pred_region
          _
        $region16: #{data_augmentation.1} parent=11 // pred_fallthru
          _
        // Predicated region
        $region17: #{data_augmentation.1} parent=11 // pred_check
          %p168 = pneg %p82
        $region18: #{data_augmentation.1} parent=11 // pred_check_branch
          %170 = sbr.rel (%p168) target = $region20
        $region19: #{data_augmentation.1} parent=11 // pred_region
          _
        $region20: #{data_augmentation.1} parent=11 // pred_fallthru
          _
        // Predicated region
        $region21: #{data_augmentation.1} parent=11 // pred_check
          %p171 = pneg %p103
        $region22: #{data_augmentation.1} parent=11 // pred_check_branch
          %173 = sbr.rel (%p171) target = $region24
        $region23: #{data_augmentation.1} parent=11 // pred_region
          _
        $region24: #{data_augmentation.1} parent=11 // pred_fallthru
          _
        // Predicated region
        $region25: #{data_augmentation.1} parent=11 // pred_check
          %p174 = pneg %p124
        $region26: #{data_augmentation.1} parent=11 // pred_check_branch
          %176 = sbr.rel (%p174) target = $region28
        $region27: #{data_augmentation.1} parent=11 // pred_region
          _
        $region28: #{data_augmentation.1} parent=11 // pred_fallthru
          _
      $region12: #{data_augmentation.1} parent=5 // pred_fallthru
        _
      %p177 = scmp.lt.s32.totalorder %s14, 4
      // Predicated region
      $region29: #{data_augmentation.1} parent=5 // pred_check
        %p178 = pneg %p177
      $region30: #{data_augmentation.1} parent=5 // pred_check_branch
        %180 = sbr.rel (%p178) target = $region32
      $region31: #{data_augmentation.1} parent=5 // pred_region
        // Predicated region
        $region33: #{data_augmentation.1} parent=31 // pred_check
          %p181 = pneg %p34
        $region34: #{data_augmentation.1} parent=31 // pred_check_branch
          %183 = sbr.rel (%p181) target = $region36
        $region35: #{data_augmentation.1} parent=31 // pred_region
          %p184 = scmp.lt.s32.totalorder %s14, 3
          %s185 = scalar_select %p184, %s14, 3
          %s186 = smul.addr %s185, 9
          %s187 = smul.addr %s186, 8
          %s188 = scalar_lea.vmem %s0, %s187
        $region36: #{data_augmentation.1} parent=31 // pred_fallthru
          _
      $region32: #{data_augmentation.1} parent=5 // pred_fallthru
        _
      %p189 = scmp.le.s32.totalorder 1, %s14
      %p190 = scmp.lt.s32.totalorder %s14, 5
      %p191 = pnand %p189, %p190
      %p192 = pneg %p191
      // Predicated region
      $region37: #{data_augmentation.1} parent=5 // pred_check
        _
      $region38: #{data_augmentation.1} parent=5 // pred_check_branch
        %194 = sbr.rel (%p191) target = $region40
      $region39: #{data_augmentation.1} parent=5 // pred_region
        %s195 = ssub.s32 %s14, 1
        %p196 = scmp.lt.s32.totalorder %s19, 3
        %s197 = scalar_select %p196, %s19, 3
        %s198 = smul.addr %s197, 9
        %s199 = smul.addr %s198, 8
        %s200 = scalar_lea.vmem %s0, %s199
        %p201 = pneg %p40
        %p202 = pneg %p37
        %p203 = pneg %p61
        %p204 = pneg %p58
        %p205 = pneg %p82
        %p206 = pneg %p79
        %p207 = pneg %p103
        %p208 = pneg %p100
        %p209 = pneg %p124
        %p210 = pneg %p121
        %p211 = pneg %p150
        %p212 = pneg %p147
        %s213 = sand.u32 %s137, 1
        %s214 = scalar_lea.sflag [#allocation3], %s213
        %s215 = sand.u32 %s137, 1
        %s216 = smul.addr %s215, 48
        %s217 = scalar_lea.vmem [#allocation2], %s216
        %p218 = scmp.lt.s32.totalorder %s19, 3
        %s219 = scalar_select %p218, %s19, 3
        %s220 = smul.addr %s219, 9
        %s221 = smul.addr %s220, 8
        %s222 = scalar_lea.vmem %s0, %s221
        %v224 = vld [vmem:[%s222] sm:$0xff]
        %v225 = vld [vmem:[%s222 + $0x8] sm:$0xff]
        %v226 = vld [vmem:[%s222 + $0x10] sm:$0xf]
        %v227 = vld [vmem:[%s222 + $0x18] sm:$0xff]
        %v228 = vld [vmem:[%s222 + $0x20] sm:$0xff]
        %v229 = vld [vmem:[%s222 + $0x28] sm:$0xf]
        %v230 = vld [vmem:[%s222 + $0x30] sm:$0xff]
        %v231 = vld [vmem:[%s222 + $0x38] sm:$0xff]
        %v232 = vld [vmem:[%s222 + $0x40] sm:$0xf]
        %v241 = vcombine.high %v224, %v224
        %v242 = vcombine.high %v225, %v225
        %v243 = vcombine.high %v227, %v227
        %v244 = vcombine.high %v228, %v228
        %v245 = vcombine.high %v230, %v230
        %v246 = vcombine.high %v231, %v231
        %v247 = vcombine.low %v224, %v241
        %v248 = vcombine.low %v225, %v242
        %v249 = vcombine.low %v226, %v227
        %v250 = vcombine.low %v243, %v228
        %v251 = vcombine.low %v244, %v229
        %v252 = vcombine.low %v230, %v245
        %v253 = vcombine.low %v231, %v246
        %v261 = vpack.c.bf16 %v248, %v247
        %v262 = vpack.c.bf16 %v250, %v249
        %v263 = vpack.c.bf16 %v252, %v251
        %v264 = vpack.c.bf16 %v232, %v253
        %v265 = vld [vmem:[%s1] sm:$0xf]
        %v266 = vld [vmem:[%s1 + $0x4] sm:$0xf]
        %v267 = vld [vmem:[%s1 + $0x8] sm:$0x3]
        %v271 = vunpack.c.l.b16 %v265
        %v272 = vunpack.c.l.b16 %v266
        %v273 = vunpack.c.l.b16 %v267
        %v274 = vpack.c.b16 %v272, %v271
        %v275 = vpack.c.b16 %v273, %v273
        %vm277 = vcmask 162816
        %v279 = vsel %vm277, %v261, 0
        %v282 = vsel %vm277, %v262, 0
        %v285 = vsel %vm277, %v263, 0
        %v288 = vsel %vm277, %v264, 0
        %vm290 = vcmask 1041408
        %v292 = vsel %vm290, %v275, 0
        %294 = vmatprep.subr.bf16.mxu0 0
        %295 = vmatpush1.bf16.msra.mxu0 0
        %296 = vmatprep.subr.bf16.mxu0 0
        %297 = vmatpush1.bf16.msra.mxu0 0
        %298 = vmatprep.subr.bf16.mxu0 0
        %299 = vmatpush1.bf16.msra.mxu0 0
        %300 = vmatprep.subr.bf16.mxu0 0
        %301 = vmatpush1.bf16.msra.mxu0 0
        %302 = vmatprep.subr.bf16.mxu0 0
        %303 = vmatpush1.bf16.msra.mxu0 0
        %304 = vmatprep.subr.bf16.mxu0 0
        %305 = vmatpush1.bf16.msra.mxu0 0
        %306 = vmatprep.subr.bf16.mxu0 0
        %307 = vmatpush1.bf16.msra.mxu0 %v292
        %308 = vmatprep.subr.bf16.mxu0 0
        %309 = vmatpush1.bf16.msra.mxu0 %v274
        %310 = vmatprep.subr.bf16.mxu0 0
        %311 = vmatpush2.bf16.msra.mxu0 0
        %312 = vmatprep.subr.bf16.mxu0 0
        %313 = vmatpush2.bf16.msra.mxu0 0
        %314 = vmatprep.subr.bf16.mxu0 0
        %315 = vmatpush2.bf16.msra.mxu0 0
        %316 = vmatprep.subr.bf16.mxu0 0
        %317 = vmatpush2.bf16.msra.mxu0 0
        %318 = vmatprep.subr.bf16.mxu0 0
        %319 = vmatpush2.bf16.msra.mxu0 0
        %320 = vmatprep.subr.bf16.mxu0 0
        %321 = vmatpush2.bf16.msra.mxu0 0
        %322 = vmatprep.subr.bf16.mxu0 0
        %323 = vmatpush2.bf16.msra.mxu0 0
        %324 = vmatprep.subr.bf16.mxu0 0
        %325 = vmatpush2.bf16.msra.mxu0 0
        %326 = vmatprep.mubr.bf16.mxu0 0
        %327 = vmatmul.mubr.bf16.gmra.mxu0 %v279
        %v328 = vpop.f32.mrf.mxu0
        %v329 = vadd.f32 0.0, %v328
        %v330 = vpop.f32.mrf.mxu0
        %v331 = vpop.f32.mrf.mxu0
        %v332 = vadd.f32 0.0, %v331
        %v333 = vpop.f32.mrf.mxu0
        %334 = vmatprep.mubr.bf16.mxu0 0
        %335 = vmatmul.mubr.bf16.gmra.mxu0 %v282
        %v336 = vpop.f32.mrf.mxu0
        %v337 = vadd.f32 0.0, %v336
        %v338 = vpop.f32.mrf.mxu0
        %v339 = vpop.f32.mrf.mxu0
        %v340 = vadd.f32 0.0, %v339
        %v341 = vpop.f32.mrf.mxu0
        %342 = vmatprep.mubr.bf16.mxu0 0
        %343 = vmatmul.mubr.bf16.gmra.mxu0 %v285
        %v344 = vpop.f32.mrf.mxu0
        %v345 = vadd.f32 0.0, %v344
        %v346 = vpop.f32.mrf.mxu0
        %v347 = vpop.f32.mrf.mxu0
        %v348 = vadd.f32 0.0, %v347
        %v349 = vpop.f32.mrf.mxu0
        %350 = vmatprep.mubr.bf16.mxu0 0
        %351 = vmatmul.mubr.bf16.gmra.mxu0 %v288
        %v352 = vpop.f32.mrf.mxu0
        %v353 = vadd.f32 0.0, %v352
        %v354 = vpop.f32.mrf.mxu0
        %v355 = vpop.f32.mrf.mxu0
        %v356 = vadd.f32 0.0, %v355
        %v357 = vpop.f32.mrf.mxu0
        %358 = vdwg.mxu0
        %v366 = vcombine.high %v329, %v329
        %v367 = vcombine.high %v332, %v332
        %v368 = vcombine.high %v337, %v337
        %v369 = vcombine.high %v340, %v340
        %v370 = vcombine.high %v345, %v345
        %v371 = vcombine.high %v348, %v348
        %v372 = vcombine.high %v353, %v353
        %v374 = vcombine.low %v329, %v366
        %v375 = vcombine.low %v332, %v367
        %v376 = vcombine.low %v368, %v340
        %v377 = vcombine.low %v369, %v345
        %v378 = vcombine.low %v348, %v371
        %v379 = vcombine.low %v353, %v372
        %v386 = vpack.c.bf16 %v375, %v374
        %v387 = vpack.c.bf16 %v337, %v337
        %v388 = vpack.c.bf16 %v377, %v376
        %v389 = vpack.c.bf16 %v370, %v370
        %v390 = vpack.c.bf16 %v379, %v378
        %v391 = vpack.c.bf16 %v356, %v356
        %v392 = vld [vmem:[%s2] sm:$0xf]
        %v393 = vld [vmem:[%s2 + $0x4] sm:$0xf]
        %v394 = vld [vmem:[%s3] sm:$0x1]
        %s395 = scalar_lea.vmem %s3, 1
        %v396 = vld [vmem:[%s395] sm:$0x1]
        %s397 = scalar_lea.vmem %s3, 2
        %v398 = vld [vmem:[%s397] sm:$0x1]
        %v399 = vld [vmem:[%s4] sm:$0x1]
        %s400 = scalar_lea.vmem %s4, 1
        %v401 = vld [vmem:[%s400] sm:$0x1]
        %s402 = scalar_lea.vmem %s4, 2
        %v403 = vld [vmem:[%s402] sm:$0x1]
        %v406 = vunpack.c.l.b16 %v392
        %v407 = vunpack.c.l.b16 %v393
        %v408 = vpack.c.b16 %v407, %v406
        %v410 = vsel %vm277, %v408, 0
        %v413 = vsel %vm290, %v387, 0
        %415 = vmatprep.subr.bf16.mxu0 0
        %416 = vmatpush1.bf16.msra.mxu0 0
        %417 = vmatprep.subr.bf16.mxu0 0
        %418 = vmatpush1.bf16.msra.mxu0 0
        %419 = vmatprep.subr.bf16.mxu0 0
        %420 = vmatpush1.bf16.msra.mxu0 0
        %421 = vmatprep.subr.bf16.mxu0 0
        %422 = vmatpush1.bf16.msra.mxu0 0
        %423 = vmatprep.subr.bf16.mxu0 0
        %424 = vmatpush1.bf16.msra.mxu0 0
        %425 = vmatprep.subr.bf16.mxu0 0
        %426 = vmatpush1.bf16.msra.mxu0 0
        %427 = vmatprep.subr.bf16.mxu0 0
        %428 = vmatpush1.bf16.msra.mxu0 %v413
        %429 = vmatprep.subr.bf16.mxu0 0
        %430 = vmatpush1.bf16.msra.mxu0 %v386
        %431 = vmatprep.subr.bf16.mxu0 0
        %432 = vmatpush2.bf16.msra.mxu0 0
        %433 = vmatprep.subr.bf16.mxu0 0
        %434 = vmatpush2.bf16.msra.mxu0 0
        %435 = vmatprep.subr.bf16.mxu0 0
        %436 = vmatpush2.bf16.msra.mxu0 0
        %437 = vmatprep.subr.bf16.mxu0 0
        %438 = vmatpush2.bf16.msra.mxu0 0
        %439 = vmatprep.subr.bf16.mxu0 0
        %440 = vmatpush2.bf16.msra.mxu0 0
        %441 = vmatprep.subr.bf16.mxu0 0
        %442 = vmatpush2.bf16.msra.mxu0 0
        %443 = vmatprep.subr.bf16.mxu0 0
        %444 = vmatpush2.bf16.msra.mxu0 0
        %445 = vmatprep.subr.bf16.mxu0 0
        %446 = vmatpush2.bf16.msra.mxu0 0
        %447 = vmatprep.mubr.bf16.mxu0 0
        %448 = vmatmul.mubr.bf16.gmra.mxu0 %v410
        %v449 = vpop.f32.mrf.mxu0
        %v450 = vadd.f32 0.0, %v449
        %v451 = vpop.f32.mrf.mxu0
        %v452 = vpop.f32.mrf.mxu0
        %v453 = vadd.f32 0.0, %v452
        %v454 = vpop.f32.mrf.mxu0
        %455 = vdwg.mxu0
        %v457 = vlaneseq
        %v458 = vshrl.u32 %v457, 7
        %v459 = vsub.s32 0, %v458
        %v460 = vrot.slane %v394, %v459
        %v462 = vmul.f32 %v450, %v460
        %v463 = vmul.f32 %v453, %v460
        %v465 = vlaneseq
        %v466 = vshrl.u32 %v465, 7
        %v467 = vsub.s32 0, %v466
        %v468 = vrot.slane %v399, %v467
        %v470 = vadd.f32 %v462, %v468
        %v471 = vadd.f32 %v463, %v468
        %vm472 = vcmask 130048
        %473 = vst.msk [vmem:[%s217] sm:$0xff] %vm472, %v470
        %474 = vst.msk [vmem:[%s217 + $0x8] sm:$0xff] %vm472, %v471
        %v476 = vsel %vm290, %v389, 0
        %478 = vmatprep.subr.bf16.mxu0 0
        %479 = vmatpush1.bf16.msra.mxu0 0
        %480 = vmatprep.subr.bf16.mxu0 0
        %481 = vmatpush1.bf16.msra.mxu0 0
        %482 = vmatprep.subr.bf16.mxu0 0
        %483 = vmatpush1.bf16.msra.mxu0 0
        %484 = vmatprep.subr.bf16.mxu0 0
        %485 = vmatpush1.bf16.msra.mxu0 0
        %486 = vmatprep.subr.bf16.mxu0 0
        %487 = vmatpush1.bf16.msra.mxu0 0
        %488 = vmatprep.subr.bf16.mxu0 0
        %489 = vmatpush1.bf16.msra.mxu0 0
        %490 = vmatprep.subr.bf16.mxu0 0
        %491 = vmatpush1.bf16.msra.mxu0 %v476
        %492 = vmatprep.subr.bf16.mxu0 0
        %493 = vmatpush1.bf16.msra.mxu0 %v388
        %494 = vmatprep.subr.bf16.mxu0 0
        %495 = vmatpush2.bf16.msra.mxu0 0
        %496 = vmatprep.subr.bf16.mxu0 0
        %497 = vmatpush2.bf16.msra.mxu0 0
        %498 = vmatprep.subr.bf16.mxu0 0
        %499 = vmatpush2.bf16.msra.mxu0 0
        %500 = vmatprep.subr.bf16.mxu0 0
        %501 = vmatpush2.bf16.msra.mxu0 0
        %502 = vmatprep.subr.bf16.mxu0 0
        %503 = vmatpush2.bf16.msra.mxu0 0
        %504 = vmatprep.subr.bf16.mxu0 0
        %505 = vmatpush2.bf16.msra.mxu0 0
        %506 = vmatprep.subr.bf16.mxu0 0
        %507 = vmatpush2.bf16.msra.mxu0 0
        %508 = vmatprep.subr.bf16.mxu0 0
        %509 = vmatpush2.bf16.msra.mxu0 0
        %510 = vmatprep.mubr.bf16.mxu0 0
        %511 = vmatmul.mubr.bf16.gmra.mxu0 %v410
        %v512 = vpop.f32.mrf.mxu0
        %v513 = vadd.f32 0.0, %v512
        %v514 = vpop.f32.mrf.mxu0
        %v515 = vpop.f32.mrf.mxu0
        %v516 = vadd.f32 0.0, %v515
        %v517 = vpop.f32.mrf.mxu0
        %518 = vdwg.mxu0
        %v520 = vlaneseq
        %v521 = vshrl.u32 %v520, 7
        %v522 = vsub.s32 0, %v521
        %v523 = vrot.slane %v396, %v522
        %v525 = vmul.f32 %v513, %v523
        %v526 = vmul.f32 %v516, %v523
        %v528 = vlaneseq
        %v529 = vshrl.u32 %v528, 7
        %v530 = vsub.s32 0, %v529
        %v531 = vrot.slane %v401, %v530
        %v533 = vadd.f32 %v525, %v531
        %v534 = vadd.f32 %v526, %v531
        %s535 = scalar_lea.vmem %s217, 16 [#allocation2]
        %536 = vst.msk [vmem:[%s535] sm:$0xff] %vm472, %v533
        %537 = vst.msk [vmem:[%s535 + $0x8] sm:$0xff] %vm472, %v534
        %v539 = vsel %vm290, %v391, 0
        %541 = vmatprep.subr.bf16.mxu0 0
        %542 = vmatpush1.bf16.msra.mxu0 0
        %543 = vmatprep.subr.bf16.mxu0 0
        %544 = vmatpush1.bf16.msra.mxu0 0
        %545 = vmatprep.subr.bf16.mxu0 0
        %546 = vmatpush1.bf16.msra.mxu0 0
        %547 = vmatprep.subr.bf16.mxu0 0
        %548 = vmatpush1.bf16.msra.mxu0 0
        %549 = vmatprep.subr.bf16.mxu0 0
        %550 = vmatpush1.bf16.msra.mxu0 0
        %551 = vmatprep.subr.bf16.mxu0 0
        %552 = vmatpush1.bf16.msra.mxu0 0
        %553 = vmatprep.subr.bf16.mxu0 0
        %554 = vmatpush1.bf16.msra.mxu0 %v539
        %555 = vmatprep.subr.bf16.mxu0 0
        %556 = vmatpush1.bf16.msra.mxu0 %v390
        %557 = vmatprep.subr.bf16.mxu0 0
        %558 = vmatpush2.bf16.msra.mxu0 0
        %559 = vmatprep.subr.bf16.mxu0 0
        %560 = vmatpush2.bf16.msra.mxu0 0
        %561 = vmatprep.subr.bf16.mxu0 0
        %562 = vmatpush2.bf16.msra.mxu0 0
        %563 = vmatprep.subr.bf16.mxu0 0
        %564 = vmatpush2.bf16.msra.mxu0 0
        %565 = vmatprep.subr.bf16.mxu0 0
        %566 = vmatpush2.bf16.msra.mxu0 0
        %567 = vmatprep.subr.bf16.mxu0 0
        %568 = vmatpush2.bf16.msra.mxu0 0
        %569 = vmatprep.subr.bf16.mxu0 0
        %570 = vmatpush2.bf16.msra.mxu0 0
        %571 = vmatprep.subr.bf16.mxu0 0
        %572 = vmatpush2.bf16.msra.mxu0 0
        %573 = vmatprep.mubr.bf16.mxu0 0
        %574 = vmatmul.mubr.bf16.gmra.mxu0 %v410
        %v575 = vpop.f32.mrf.mxu0
        %v576 = vadd.f32 0.0, %v575
        %v577 = vpop.f32.mrf.mxu0
        %v578 = vpop.f32.mrf.mxu0
        %v579 = vadd.f32 0.0, %v578
        %v580 = vpop.f32.mrf.mxu0
        %581 = vdwg.mxu0
        %v583 = vlaneseq
        %v584 = vshrl.u32 %v583, 7
        %v585 = vsub.s32 0, %v584
        %v586 = vrot.slane %v398, %v585
        %v588 = vmul.f32 %v576, %v586
        %v589 = vmul.f32 %v579, %v586
        %v591 = vlaneseq
        %v592 = vshrl.u32 %v591, 7
        %v593 = vsub.s32 0, %v592
        %v594 = vrot.slane %v403, %v593
        %v596 = vadd.f32 %v588, %v594
        %v597 = vadd.f32 %v589, %v594
        %s598 = scalar_lea.vmem %s217, 32 [#allocation2]
        %599 = vst.msk [vmem:[%s598] sm:$0xff] %vm472, %v596
        %600 = vst.msk [vmem:[%s598 + $0x8] sm:$0xff] %vm472, %v597
        %s601 = sand.u32 %s137, 1
        %s602 = scalar_lea.sflag [#allocation3], %s601
        %s603 = sand.u32 %s137, 1
        %s604 = smul.addr %s603, 48
        %s605 = scalar_lea.vmem [#allocation2], %s604
        // Predicated region
        $region41: #{data_augmentation.1} parent=39 // pred_check
          %p606 = pneg %p147
        $region42: #{data_augmentation.1} parent=39 // pred_check_branch
          %608 = sbr.rel (%p606) target = $region44
        $region43: #{data_augmentation.1} parent=39 // pred_region
          %s610 = ssub.s32 768, 768
          %611 = vsyncadd %s602, %s610
          %s612 = smul.addr %s19, 6
          %s613 = smul.addr %s612, 128
          %s614 = scalar_lea.hbm %s5, %s613
          %s615 = sshll.u32 %s605, 4
          %s616 = int_to_ptr.vmem [resolvable:$true] %s615
          %621 = dma.vmem_to_hbm [thread:$0]  %s616, 768, %s614, %s602, 128, 128, 8
        $region44: #{data_augmentation.1} parent=39 // pred_fallthru
          _
      $region40: #{data_augmentation.1} parent=5 // pred_fallthru
        _
      %p622 = scmp.le.s32.totalorder 2, %s14
      // Predicated region
      $region45: #{data_augmentation.1} parent=5 // pred_check
        %p623 = pneg %p622
      $region46: #{data_augmentation.1} parent=5 // pred_check_branch
        %625 = sbr.rel (%p623) target = $region48
      $region47: #{data_augmentation.1} parent=5 // pred_region
        %s626 = ssub.s32 %s14, 2
        // Predicated region
        $region49: #{data_augmentation.1} parent=47 // pred_check
          %p627 = pneg %p153
        $region50: #{data_augmentation.1} parent=47 // pred_check_branch
          %629 = sbr.rel (%p627) target = $region52
        $region51: #{data_augmentation.1} parent=47 // pred_region
          %s630 = sand.u32 %s138, 1
          %s631 = scalar_lea.sflag [#allocation3], %s630
          %s632 = sand.u32 %s138, 1
          %s633 = smul.addr %s632, 48
          %s634 = scalar_lea.vmem [#allocation2], %s633
          %635 = dma.done %s631, 768
        $region52: #{data_augmentation.1} parent=47 // pred_fallthru
          _
      $region48: #{data_augmentation.1} parent=5 // pred_fallthru
        _
    $region6: #{data_augmentation.1} parent=1 // loop_footer
      %s18 = sadd.s32 1, %s14
    $region7: #{data_augmentation.1} parent=1 // loop_footer_branch
      %13 = sbr.rel target = $region3
    $region8: #{data_augmentation.1} parent=1 // loop_exit
      _
    %636 = vsyncpa [#allocation3], 1
    %s637 = scalar_lea.sflag [#allocation3], 1
    %638 = vsyncpa %s637, 1

</llo_original>
